<compile_context>
chip_gen: v7x
topology: tpu7x:2x2x1
jax: 0.10.0
libtpu: 0.0.40
codegen_flags: <defaults>
</compile_context>

<pallas_src>
import functools

import jax
import jax.numpy as jnp
from jax.experimental import pallas as pl
from jax.experimental.pallas import tpu as pltpu

_MIB = 1024 * 1024


def _round_up(x, n):
    return ((x + n - 1) // n) * n


def _chip_profile():
    """Per-generation knobs: (vmem_budget, vmem_limit_cap, num_tensorcores, bf16_compute)."""
    try:
        kind = jax.devices()[0].device_kind.lower()
    except Exception:
        kind = ""

    if "v2" in kind or "v3" in kind:
        cap, num_tc, bf16 = 16 * _MIB, 1, False
    elif "v4" in kind:
        cap, num_tc, bf16 = 128 * _MIB, 2, False
    elif "v5" in kind:
        lite = ("lite" in kind) or ("5e" in kind)
        cap, num_tc, bf16 = 128 * _MIB, (1 if lite else 2), False
    elif "v6" in kind:
        cap, num_tc, bf16 = 128 * _MIB, 1, True
    elif "7" in kind:
        cap, num_tc, bf16 = 64 * _MIB, 2, True
    else:
        # Unknown / future chip: assume the tighter v7x-style budget.
        cap, num_tc, bf16 = 64 * _MIB, 2, True

    # Refine with the runtime-reported VMEM capacity when available (take the
    # min so a per-chip vs per-core ambiguity can never over-claim VMEM).
    try:
        info = pltpu.get_tpu_info()
        queried = int(getattr(info, "vmem_capacity_bytes", 0))
        if queried > 0:
            cap = min(cap, queried)
    except Exception:
        pass

    if cap <= 32 * _MIB:
        # Tiny VMEM (v2/v3): keep the compiler's default scoped limit.
        return (3 * cap) // 8, None, num_tc, bf16

    budget = (3 * cap) // 4                              # working-set budget
    limit_cap = min((17 * cap) // 20, cap - 8 * _MIB)    # never all of physical VMEM
    return budget, limit_cap, num_tc, bf16


def _vmem_limit_bytes(working_bytes, limit_cap):
    if limit_cap is None:
        return None
    return int(min(limit_cap, max(32 * _MIB, working_bytes + 16 * _MIB)))


def _silu_mul(a, b, *, approx):
    # silu(a) * b == a * (1 / (1 + exp(-a))) * b.  The reciprocal is computed
    # in f32 on the EUP (approx only when the final output is bf16); the
    # surrounding multiplies stay in the compute dtype.
    a32 = a.astype(jnp.float32)
    sig = pl.reciprocal(1.0 + jnp.exp(-a32), approx=approx)
    return a * sig.astype(a.dtype) * b


def _silu_and_mul_split_kernel(a_ref, b_ref, o_ref, *, compute_dtype, approx):
    a = a_ref[...].astype(compute_dtype)
    b = b_ref[...].astype(compute_dtype)
    o_ref[...] = _silu_mul(a, b, approx=approx).astype(o_ref.dtype)


def _silu_and_mul_fused_kernel(x_ref, o_ref, *, compute_dtype, approx):
    # Fallback for lane-unaligned hidden sizes: whole (tm, 2*d) row tile.
    # TODO(synk): if this path is ever hot, pad d to a multiple of 128 in the
    # wrapper and route through the split path (the in-kernel slice below and
    # the <128-lane output store are both slow).
    d = o_ref.shape[-1]
    a = x_ref[:, :d].astype(compute_dtype)
    b = x_ref[:, d:].astype(compute_dtype)
    o_ref[...] = _silu_mul(a, b, approx=approx).astype(o_ref.dtype)


def silu_and_mul(x, *, row_tile=None):
    """Pallas equivalent of SiluAndMul.forward: chunk last dim in 2, silu(x) * y."""
    two_d = x.shape[-1]
    assert two_d % 2 == 0, "last dim must be even"
    d = two_d // 2

    lead_shape = x.shape[:-1]
    m = 1
    for s in lead_shape:
        m *= s
    x2 = x.reshape(m, two_d)

    vmem_budget, limit_cap, num_tc, bf16_ok = _chip_profile()
    itemsize = jnp.dtype(x.dtype).itemsize
    compute_dtype = (
        jnp.bfloat16 if (x.dtype == jnp.bfloat16 and bf16_ok) else jnp.float32
    )
    approx = x.dtype == jnp.bfloat16
    sub = 8 * max(1, 4 // itemsize)  # sublane granularity: 8 (f32) / 16 (bf16)

    cost = pl.CostEstimate(
        flops=4 * m * d,
        transcendentals=m * d,
        bytes_accessed=m * (two_d + d) * itemsize,
    )

    if d % 128 == 0:
        # ---- Split path: gate/up halves as two lane-aligned specs over x2. ----
        # Full-width lane tile keeps every DMA row as long as possible and the
        # store fully lane-dense; only absurdly wide hiddens get lane-tiled with
        # the largest 128-multiple divisor that still fits at the minimum row
        # tile (so the up-half block offset stays exact).
        tn_eff = d
        if 6 * sub * tn_eff * itemsize > vmem_budget:
            tn_eff = 128
            cand = 256
            while cand <= d and 6 * sub * cand * itemsize <= vmem_budget:
                if d % cand == 0:
                    tn_eff = cand
                cand += 128
        d_blocks = d // tn_eff

        # Row tile: sublane-aligned, sized to the double-buffered VMEM budget
        # (2 inputs + 1 output, x2 buffers each).
        fit = max(sub, (vmem_budget // (6 * tn_eff * itemsize)) // sub * sub)
        want = row_tile if row_tile is not None else 1024
        tm_eff = max(sub, min(_round_up(want, sub), _round_up(m, sub), fit))

        # Only force >= 2 grid steps on chips with 2 TensorCores (megacore/v7x);
        # on single-core v5e/v6e the split is pure per-step overhead.
        if num_tc >= 2:
            while pl.cdiv(m, tm_eff) * d_blocks < 2 and tm_eff > sub and m > sub:
                tm_eff = max(sub, _round_up(tm_eff // 2, sub))

        working = 6 * tm_eff * tn_eff * itemsize
        vmem_limit = _vmem_limit_bytes(working, limit_cap)

        cp_kwargs = dict(dimension_semantics=("parallel", "parallel"))
        if vmem_limit is not None:
            cp_kwargs["vmem_limit_bytes"] = vmem_limit

        kernel = functools.partial(
            _silu_and_mul_split_kernel, compute_dtype=compute_dtype, approx=approx
        )
        out2 = pl.pallas_call(
            kernel,
            out_shape=jax.ShapeDtypeStruct((m, d), x.dtype),
            grid_spec=pltpu.PrefetchScalarGridSpec(
                num_scalar_prefetch=0,
                grid=(pl.cdiv(m, tm_eff), d_blocks),
                in_specs=[
                    pl.BlockSpec((tm_eff, tn_eff), lambda i, j: (i, j)),
                    pl.BlockSpec((tm_eff, tn_eff), lambda i, j: (i, j + d_blocks)),
                ],
                out_specs=pl.BlockSpec((tm_eff, tn_eff), lambda i, j: (i, j)),
            ),
            compiler_params=pltpu.CompilerParams(**cp_kwargs),
            cost_estimate=cost,
        )(x2, x2)
    else:
        # ---- Fallback for small / lane-unaligned hidden sizes. ----
        fit = max(sub, (vmem_budget // (6 * max(d, 1) * itemsize)) // sub * sub)
        want = row_tile if row_tile is not None else 1024
        tm_eff = max(sub, min(_round_up(want, sub), _round_up(m, sub), fit))
        if num_tc >= 2:
            while pl.cdiv(m, tm_eff) < 2 and tm_eff > sub and m > sub:
                tm_eff = max(sub, _round_up(tm_eff // 2, sub))

        working = 6 * tm_eff * d * itemsize  # (tm,2d) in + (tm,d) out, double-buffered
        vmem_limit = _vmem_limit_bytes(working, limit_cap)

        cp_kwargs = dict(dimension_semantics=("parallel",))
        if vmem_limit is not None:
            cp_kwargs["vmem_limit_bytes"] = vmem_limit

        kernel = functools.partial(
            _silu_and_mul_fused_kernel, compute_dtype=compute_dtype, approx=approx
        )
        out2 = pl.pallas_call(
            kernel,
            out_shape=jax.ShapeDtypeStruct((m, d), x.dtype),
            grid_spec=pltpu.PrefetchScalarGridSpec(
                num_scalar_prefetch=0,
                grid=(pl.cdiv(m, tm_eff),),
                in_specs=[pl.BlockSpec((tm_eff, two_d), lambda i: (i, 0))],
                out_specs=pl.BlockSpec((tm_eff, d), lambda i: (i, 0)),
            ),
            compiler_params=pltpu.CompilerParams(**cp_kwargs),
            cost_estimate=cost,
        )(x2)

    return out2.reshape(*lead_shape, d)


if __name__ == "__main__":
    key = jax.random.PRNGKey(0)
    k1, k2, k3 = jax.random.split(key, 3)

    def ref_fn(x):
        a, b = jnp.split(x, 2, axis=-1)
        return a * jax.nn.sigmoid(a) * b

    # Case 1: small, lane-unaligned hidden (fallback path), f32.
    batch, seq, hidden = 2, 8, 32
    x1 = jax.random.normal(k1, (batch, seq, 2 * hidden), dtype=jnp.float32)
    o1 = silu_and_mul(x1)
    jax.block_until_ready(o1)
    assert o1.shape == (batch, seq, hidden)
    assert jnp.allclose(o1, ref_fn(x1), atol=1e-5, rtol=1e-5)

    # Case 2: lane-aligned hidden with ragged row count (split path), f32.
    x2 = jax.random.normal(k2, (3, 13, 2 * 256), dtype=jnp.float32)
    o2 = silu_and_mul(x2)
    jax.block_until_ready(o2)
    assert o2.shape == (3, 13, 256)
    assert jnp.allclose(o2, ref_fn(x2), atol=1e-5, rtol=1e-5)

    # Case 3: bf16 input (bf16 muls on v6e+, f32 compute on older chips).
    x3 = jax.random.normal(k3, (2, 24, 2 * 256), dtype=jnp.bfloat16)
    o3 = silu_and_mul(x3)
    jax.block_until_ready(o3)
    ref3 = ref_fn(x3.astype(jnp.float32)).astype(jnp.bfloat16)
    assert o3.shape == (2, 24, 256)
    assert jnp.allclose(
        o3.astype(jnp.float32), ref3.astype(jnp.float32), atol=5e-2, rtol=5e-2
    )

    print("KERNEL_OK")
</pallas_src>

<mosaic_0001>
module attributes {stable_mosaic.version = 11 : i64} {
  func.func @_silu_and_mul_fused_kernel(%arg0: i32, %arg1: memref<8x64xf32, #tpu.memory_space<vmem>>, %arg2: memref<8x32xf32, #tpu.memory_space<vmem>>) attributes {dimension_semantics = [#tpu.dimension_semantics<parallel>], iteration_bounds = array<i64: 2>, scalar_prefetch = 0 : i64, scratch_operands = 0 : i64, tpu.core_type = #tpu.core_type<tc>, window_params = [{transform_indices = @transform_0, window_bounds = array<i64: 8, 64>}, {transform_indices = @transform_1, window_bounds = array<i64: 8, 32>}]} {
    %c0 = arith.constant 0 : index
    %c0_0 = arith.constant 0 : index
    %0 = vector.load %arg1[%c0, %c0_0] : memref<8x64xf32, #tpu.memory_space<vmem>>, vector<8x32xf32>
    %c0_1 = arith.constant 0 : index
    %c32 = arith.constant 32 : index
    %1 = vector.load %arg1[%c0_1, %c32] : memref<8x64xf32, #tpu.memory_space<vmem>>, vector<8x32xf32>
    %cst = arith.constant 0.000000e+00 : f32
    %2 = vector.broadcast %cst : f32 to vector<8x32xf32>
    %3 = arith.subf %2, %0 : vector<8x32xf32>
    %4 = math.exp %3 : vector<8x32xf32>
    %cst_2 = arith.constant 1.000000e+00 : f32
    %5 = vector.broadcast %cst_2 : f32 to vector<8x32xf32>
    %6 = arith.addf %5, %4 : vector<8x32xf32>
    %7 = tpu.reciprocal %6 : vector<8x32xf32> -> vector<8x32xf32>
    %8 = arith.mulf %0, %7 : vector<8x32xf32>
    %9 = arith.mulf %8, %1 : vector<8x32xf32>
    %c0_3 = arith.constant 0 : index
    %c0_4 = arith.constant 0 : index
    %10 = vector.load %arg2[%c0_3, %c0_4] : memref<8x32xf32, #tpu.memory_space<vmem>>, vector<8x32xf32>
    tpu.vector_store %arg2[%c0_3, %c0_4], %9 {strides = array<i32>} : memref<8x32xf32, #tpu.memory_space<vmem>>, vector<8x32xf32>,
    return
  }
  func.func @transform_0(%arg0: i32) -> (i32, i32) {
    %c0_i32 = arith.constant 0 : i32
    %c0_i32_0 = arith.constant 0 : i32
    return %arg0, %c0_i32 : i32, i32
  }
  func.func @transform_1(%arg0: i32) -> (i32, i32) {
    %c0_i32 = arith.constant 0 : i32
    %c0_i32_0 = arith.constant 0 : i32
    return %arg0, %c0_i32 : i32, i32
  }
}

</mosaic_0001>

<llo_original>
// kernel: tpu_custom_call.1
$region0: #{tpu_custom_call.1}
  #allocation0 [shape = 'u32[]', space=smem, size = 0x4, offset = 0x4, fixed_abs, tag = 'smem constant byte address 0x4 - core index']
  #allocation1 [shape = 'u32[144,128]{1,0:T(1,128)}', space=vmem, size = 0x12000, scoped, tag = 'internal scratch']
  %s0 = inlined_call_operand.hbm [shape: f32[16,64], index: 0, kind: input, shape index: {}]
  %s1 = inlined_call_operand.hbm [shape: f32[16,32], index: 1, kind: output, shape index: {}]
  %s2 = sld [smem:[#allocation0]]
  $region41: #{tpu_custom_call.1} parent=0
    _
  %s4 = ssub.s32 1, %s2
  %s5 = scalar_select 0, %s4, %s2
  $region1: #{tpu_custom_call.1} parent=0
    #allocation2 [shape = 'u8[8192]{0}', space=vmem, size = 0x2000, scoped, tag = 'input window, operand 0']
    #allocation3 [shape = 's32[2]{0}', space=sflag, size = 0x8, scoped, tag = 'scoped memory for tpu_custom_call.1']
    #allocation4 [shape = 's32[2]{0}', space=sflag, size = 0x8, scoped, tag = 'scoped memory for tpu_custom_call.1']
    #allocation5 [shape = 'u8[8192]{0}', space=vmem, size = 0x2000, scoped, tag = 'output window, operand 0']
    %6 = vsyncpa [#allocation3], 0
    %s7 = scalar_lea.sflag [#allocation3], 1
    %8 = vsyncpa %s7, 0
    %9 = vsyncpa [#allocation4], 0
    %s10 = scalar_lea.sflag [#allocation4], 1
    %11 = vsyncpa %s10, 0
    loop: start=0, step=1, limit=4
    $region2: #{tpu_custom_call.1} parent=1 // loop_pre_header
      _
    $region3: #{tpu_custom_call.1} parent=1 // loop_header
      %s13 = sphi 0, %s17
      %p14 = scmp.ge.s32.totalorder %s13, 4
      %s23 = sphi 0, %s25
      %s26 = sphi 0, %s23
      %s27 = sphi 0, %s26
      %s43 = sphi 0, %s27
      %s49 = sphi 0, %s51
      %s52 = sphi 0, %s49
      %s53 = sphi 0, %s52
      %s69 = sphi 0, %s53
    $region4: #{tpu_custom_call.1} parent=1 // loop_header_branch
      %16 = sbr.rel (%p14) target = $region8
    $region5: #{tpu_custom_call.1} parent=1 // loop_body
      %s18 = ssub.s32 %s13, 1
      %s19 = ssub.s32 %s13, 2
      %s20 = sadd.s32 %s13, 1
      %s21 = ssub.s32 %s13, %s20
      %p22 = scmp.eq.s32.totalorder %s21, 0
      %s24 = sadd.s32 %s23, 1
      %s25 = scalar_select %p22, %s23, %s24
      %p28 = pneg %p22
      %p29 = scmp.eq.s32.totalorder %s13, 1
      %p30 = por %p28, %p29
      %p31 = scmp.ne.s32.totalorder %s23, %s26
      %p32 = scmp.eq.s32.totalorder %s13, 0
      %p33 = por %p31, %p32
      %p34 = scmp.ne.s32.totalorder %s23, %s26
      %p35 = scmp.eq.s32.totalorder %s18, 1
      %p36 = por %p34, %p35
      %p37 = scmp.ne.s32.totalorder %s26, %s27
      %p38 = scmp.eq.s32.totalorder %s18, 0
      %p39 = por %p37, %p38
      %p40 = scmp.ne.s32.totalorder %s26, %s27
      %p41 = scmp.eq.s32.totalorder %s19, 1
      %p42 = por %p40, %p41
      %p44 = scmp.ne.s32.totalorder %s27, %s43
      %p45 = scmp.eq.s32.totalorder %s19, 0
      %p46 = por %p44, %p45
      %s47 = ssub.s32 %s13, %s20
      %p48 = scmp.eq.s32.totalorder %s47, 0
      %s50 = sadd.s32 %s49, 1
      %s51 = scalar_select %p48, %s49, %s50
      %p54 = pneg %p48
      %p55 = scmp.eq.s32.totalorder %s13, 1
      %p56 = por %p54, %p55
      %p57 = scmp.ne.s32.totalorder %s49, %s52
      %p58 = scmp.eq.s32.totalorder %s13, 0
      %p59 = por %p57, %p58
      %p60 = scmp.ne.s32.totalorder %s49, %s52
      %p61 = scmp.eq.s32.totalorder %s18, 1
      %p62 = por %p60, %p61
      %p63 = scmp.ne.s32.totalorder %s52, %s53
      %p64 = scmp.eq.s32.totalorder %s18, 0
      %p65 = por %p63, %p64
      %p66 = scmp.ne.s32.totalorder %s52, %s53
      %p67 = scmp.eq.s32.totalorder %s19, 1
      %p68 = por %p66, %p67
      %p70 = scmp.ne.s32.totalorder %s53, %s69
      %p71 = scmp.eq.s32.totalorder %s19, 0
      %p72 = por %p70, %p71
      %p73 = scmp.le.s32.totalorder 1, %s13
      %p74 = scmp.lt.s32.totalorder %s13, 3
      %p75 = pnand %p73, %p74
      %p76 = pneg %p75
      // Predicated region
      $region9: #{tpu_custom_call.1} parent=5 // pred_check
        _
      $region10: #{tpu_custom_call.1} parent=5 // pred_check_branch
        %78 = sbr.rel (%p75) target = $region12
      $region11: #{tpu_custom_call.1} parent=5 // pred_region
        %s79 = ssub.s32 %s13, 1
      $region12: #{tpu_custom_call.1} parent=5 // pred_fallthru
        _
      %p80 = scmp.lt.s32.totalorder %s13, 2
      // Predicated region
      $region13: #{tpu_custom_call.1} parent=5 // pred_check
        %p81 = pneg %p80
      $region14: #{tpu_custom_call.1} parent=5 // pred_check_branch
        %83 = sbr.rel (%p81) target = $region16
      $region15: #{tpu_custom_call.1} parent=5 // pred_region
        // Predicated region
        $region17: #{tpu_custom_call.1} parent=15 // pred_check
          %p84 = pneg %p33
        $region18: #{tpu_custom_call.1} parent=15 // pred_check_branch
          %86 = sbr.rel (%p84) target = $region20
        $region19: #{tpu_custom_call.1} parent=15 // pred_region
          %s87 = sand.u32 %s23, 1
          %s88 = scalar_lea.sflag [#allocation3], %s87
          %s89 = sand.u32 %s23, 1
          %s90 = smul.addr %s89, 8
          %s91 = scalar_lea.vmem [#allocation2], %s90
          %s93 = ssub.s32 128, 128
          %94 = vsyncadd %s88, %s93
          %s95 = smul.addr %s13, 128
          %s96 = scalar_lea.hbm %s0, %s95
          %s98 = sshll.u32 %s91, 4
          %s99 = int_to_ptr.vmem [resolvable:$true] %s98
          %101 = dma.hbm_to_vmem [thread:$0]  %s96, 128, %s99, %s88
        $region20: #{tpu_custom_call.1} parent=15 // pred_fallthru
          _
      $region16: #{tpu_custom_call.1} parent=5 // pred_fallthru
        _
      %p102 = scmp.le.s32.totalorder 1, %s13
      %p103 = scmp.lt.s32.totalorder %s13, 3
      %p104 = pnand %p102, %p103
      %p105 = pneg %p104
      // Predicated region
      $region21: #{tpu_custom_call.1} parent=5 // pred_check
        _
      $region22: #{tpu_custom_call.1} parent=5 // pred_check_branch
        %107 = sbr.rel (%p104) target = $region24
      $region23: #{tpu_custom_call.1} parent=5 // pred_region
        %s108 = ssub.s32 %s13, 1
        %s109 = sand.u32 %s26, 1
        %s110 = scalar_lea.sflag [#allocation3], %s109
        %s111 = sand.u32 %s26, 1
        %s112 = smul.addr %s111, 8
        %s113 = scalar_lea.vmem [#allocation2], %s112
        // Predicated region
        $region25: #{tpu_custom_call.1} parent=23 // pred_check
          %p114 = pneg %p39
        $region26: #{tpu_custom_call.1} parent=23 // pred_check_branch
          %116 = sbr.rel (%p114) target = $region28
        $region27: #{tpu_custom_call.1} parent=23 // pred_region
          %117 = dma.done %s110, 128
        $region28: #{tpu_custom_call.1} parent=23 // pred_fallthru
          _
        %s118 = sand.u32 %s26, 1
        %s119 = scalar_lea.sflag [#allocation3], %s118
        %s120 = sand.u32 %s26, 1
        %s121 = smul.addr %s120, 8
        %s122 = scalar_lea.vmem [#allocation2], %s121
        %p123 = pneg %p39
        %p124 = pneg %p36
        %p125 = pneg %p65
        %p126 = pneg %p62
        %s127 = sand.u32 %s52, 1
        %s128 = scalar_lea.sflag [#allocation4], %s127
        %s129 = sand.u32 %s52, 1
        %s130 = smul.addr %s129, 8
        %s131 = scalar_lea.vmem [#allocation5], %s130
        %v132 = vld [vmem:[%s113] sm:$0xff]
        %v133 = vsub.f32 0.0, %v132
        %v134 = vmul.f32 %v133, 1.442695
        %v135 = vpow.pop %v134
        %v136 = vadd.f32 %v135, 1.0
        %v137 = vrcp.pop %v136
        %v138 = vmul.f32 %v132, %v137
        %140 = vrot.lane.b32.xlu0 %v132, 96
        %v141 = vpop.permute.xlu0 %140
        %v143 = vmul.f32 %v138, %v141
        %vm144 = vcmask 261120
        %145 = vst.msk [vmem:[%s131] sm:$0xff] %vm144, %v143
        %s146 = sand.u32 %s52, 1
        %s147 = scalar_lea.sflag [#allocation4], %s146
        %s148 = sand.u32 %s52, 1
        %s149 = smul.addr %s148, 8
        %s150 = scalar_lea.vmem [#allocation5], %s149
        // Predicated region
        $region29: #{tpu_custom_call.1} parent=23 // pred_check
          %p151 = pneg %p62
        $region30: #{tpu_custom_call.1} parent=23 // pred_check_branch
          %153 = sbr.rel (%p151) target = $region32
        $region31: #{tpu_custom_call.1} parent=23 // pred_region
          %s155 = ssub.s32 128, 128
          %156 = vsyncadd %s147, %s155
          %s157 = smul.addr %s18, 128
          %s158 = scalar_lea.hbm %s1, %s157
          %s160 = sshll.u32 %s150, 4
          %s161 = int_to_ptr.vmem [resolvable:$true] %s160
          %163 = dma.vmem_to_hbm [thread:$0]  %s161, 128, %s158, %s147
        $region32: #{tpu_custom_call.1} parent=23 // pred_fallthru
          _
      $region24: #{tpu_custom_call.1} parent=5 // pred_fallthru
        _
      %p164 = scmp.le.s32.totalorder 2, %s13
      // Predicated region
      $region33: #{tpu_custom_call.1} parent=5 // pred_check
        %p165 = pneg %p164
      $region34: #{tpu_custom_call.1} parent=5 // pred_check_branch
        %167 = sbr.rel (%p165) target = $region36
      $region35: #{tpu_custom_call.1} parent=5 // pred_region
        %s168 = ssub.s32 %s13, 2
        // Predicated region
        $region37: #{tpu_custom_call.1} parent=35 // pred_check
          %p169 = pneg %p68
        $region38: #{tpu_custom_call.1} parent=35 // pred_check_branch
          %171 = sbr.rel (%p169) target = $region40
        $region39: #{tpu_custom_call.1} parent=35 // pred_region
          %s172 = sand.u32 %s53, 1
          %s173 = scalar_lea.sflag [#allocation4], %s172
          %s174 = sand.u32 %s53, 1
          %s175 = smul.addr %s174, 8
          %s176 = scalar_lea.vmem [#allocation5], %s175
          %177 = dma.done %s173, 128
        $region40: #{tpu_custom_call.1} parent=35 // pred_fallthru
          _
      $region36: #{tpu_custom_call.1} parent=5 // pred_fallthru
        _
    $region6: #{tpu_custom_call.1} parent=1 // loop_footer
      %s17 = sadd.s32 1, %s13
    $region7: #{tpu_custom_call.1} parent=1 // loop_footer_branch
      %12 = sbr.rel target = $region3
    $region8: #{tpu_custom_call.1} parent=1 // loop_exit
      _
    %178 = vsyncpa [#allocation3], 1
    %s179 = scalar_lea.sflag [#allocation3], 1
    %180 = vsyncpa %s179, 1
    %181 = vsyncpa [#allocation4], 1
    %s182 = scalar_lea.sflag [#allocation4], 1
    %183 = vsyncpa %s182, 1

</llo_original>
